<compile_context>
chip_gen: v7x
topology: tpu7x:2x2x1
jax: 0.10.0
libtpu: 0.0.40
codegen_flags: <defaults>
</compile_context>

<pallas_src>
import jax
import jax.numpy as jnp
from jax import lax
from jax.experimental import pallas as pl
from jax.experimental.pallas import tpu as pltpu


def _make_kernel(k_imgs, cin, cconv, ho, wo):
    """Kernel processing `k_imgs` whole images per grid step."""
    howo = ho * wo

    def kernel(phase_ref, w_ref, shift_c_ref, scale_p_ref, shift_p_ref, out_ref):
        # Hoisted per-tile invariants (not rebuilt per image).
        lane = lax.broadcasted_iota(jnp.int32, (1, howo), 1)
        mask_w = (lane % wo) != 0            # ow > 0 (interior columns)
        w = w_ref[...]                       # (Cconv, 9*Cin)  bf16
        shift_c = shift_c_ref[...]           # (Cconv, 1)      f32
        scale_p = scale_p_ref[...]           # (Cin, 1)        f32
        shift_p = shift_p_ref[...]           # (Cin, 1)        f32

        def shift_right(t, s):
            # out[:, m] = t[:, m - s] for m >= s, zero below (== conv's
            # top/left zero padding).  Static slices + concat: exact semantics.
            if s == 0:
                return t
            z = jnp.zeros((t.shape[0], s), t.dtype)
            return jnp.concatenate([z, t[:, :howo - s]], axis=1)

        def one_image(j, carry):
            ph = phase_ref[j]                # (4, Cin, Ho*Wo) bf16
            # Rebuild the 9 stride-2 conv taps from the 4 space-to-depth phases.
            taps = []
            for kh in range(3):
                for kw in range(3):
                    p = ((kh - 1) % 2) * 2 + ((kw - 1) % 2)
                    s = (wo if kh == 0 else 0) + (1 if kw == 0 else 0)
                    t = shift_right(ph[p], s)
                    if kw == 0:              # left padding column of the conv
                        t = jnp.where(mask_w, t, 0)
                    taps.append(t)
            rhs = jnp.concatenate(taps, axis=0)                  # (9*Cin, Ho*Wo)
            conv = jnp.dot(w, rhs, preferred_element_type=jnp.float32)
            conv = jnp.maximum(conv + shift_c, 0.0)              # (Cconv, Ho*Wo)

            # MaxPool 2x2 / stride 2 == elementwise max of the 4 phases.
            pool = jnp.max(ph, axis=0).astype(jnp.float32)       # (Cin, Ho*Wo)
            pool = jnp.maximum(pool * scale_p + shift_p, 0.0)

            # Channel "concat" -> one dense (Cout, Ho*Wo) store (no masked vst).
            out_ref[j] = jnp.concatenate([conv, pool], axis=0).astype(out_ref.dtype)
            return carry

        if k_imgs <= 4:                      # static indexing path
            for j in range(k_imgs):
                one_image(j, 0)
        else:                                # bounded live ranges for large k
            lax.fori_loop(0, k_imgs, one_image, 0)

    return kernel


def downsampler_block(x_nchw, conv_w, conv_b, gamma, beta, run_mean, run_var,
                      eps=1e-5):
    """EDANet DownsamplerBlock forward (ninput < noutput branch, eval-mode BN)."""
    N, Cin, H, W = x_nchw.shape
    Cconv = conv_w.shape[0]
    Cout = Cconv + Cin
    assert Cconv > 0, "only the ninput < noutput branch is implemented"
    assert H % 2 == 0 and W % 2 == 0, "even H/W required so conv & pool sizes match"
    Ho, Wo = H // 2, W // 2
    HoWo = Ho * Wo

    xf = x_nchw.astype(jnp.float32)

    # ---- space-to-depth phases: (N, 4, Cin, Ho*Wo), phase p = dh*2+dw holds
    #      x[..., dh::2, dw::2].  bf16 to halve the HBM stream into the kernel.
    phases = jnp.stack([xf[:, :, dh::2, dw::2]
                        for dh in range(2) for dw in range(2)], axis=1)
    phases = phases.reshape(N, 4, Cin, HoWo).astype(jnp.bfloat16)

    # ---- fold conv bias + eval-mode BN into GEMM weights / per-channel consts.
    scale = gamma / jnp.sqrt(run_var + eps)                      # (Cout,)
    shift = beta - run_mean * scale                              # (Cout,)
    w_t = conv_w.transpose(0, 2, 3, 1).reshape(Cconv, 9 * Cin)   # (Cconv, 9*Cin)
    w_fold = (w_t * scale[:Cconv, None]).astype(jnp.bfloat16)
    shift_c = (shift[:Cconv] + scale[:Cconv] * conv_b).reshape(Cconv, 1).astype(jnp.float32)
    scale_p = scale[Cconv:].reshape(Cin, 1).astype(jnp.float32)
    shift_p = shift[Cconv:].reshape(Cin, 1).astype(jnp.float32)

    # ---- images per grid step from a VMEM stream budget (double-buffered
    #      input phases + f32 output), instead of a hard lane cap.
    per_img_bytes = 2 * (4 * Cin * HoWo * 2 + Cout * HoWo * 4)
    budget = 12 * 1024 * 1024          # ~12 MiB live streams: safe on v5e/v6e/v7x
    k = int(max(1, min(N, budget // max(per_img_bytes, 1))))
    N_pad = pl.cdiv(N, k) * k
    if N_pad != N:
        phases = jnp.pad(phases, ((0, N_pad - N), (0, 0), (0, 0), (0, 0)))

    kernel = _make_kernel(k, Cin, Cconv, Ho, Wo)
    out = pl.pallas_call(
        kernel,
        out_shape=jax.ShapeDtypeStruct((N_pad, Cout, HoWo), jnp.float32),
        grid=(N_pad // k,),
        in_specs=[
            pl.BlockSpec((k, 4, Cin, HoWo), lambda i: (i, 0, 0, 0)),  # phase slab
            pl.BlockSpec((Cconv, 9 * Cin), lambda i: (0, 0)),         # folded weights
            pl.BlockSpec((Cconv, 1), lambda i: (0, 0)),               # conv shift
            pl.BlockSpec((Cin, 1), lambda i: (0, 0)),                 # pool BN scale
            pl.BlockSpec((Cin, 1), lambda i: (0, 0)),                 # pool BN shift
        ],
        out_specs=pl.BlockSpec((k, Cout, HoWo), lambda i: (i, 0, 0)),
        compiler_params=pltpu.CompilerParams(
            # "parallel" shards grid steps across v7x's two TensorCores; on
            # v5e/v6e it is neutral.  Sweep pl.Buffered(3) on the phase spec
            # once per-step bytes are large, if DMA is still exposed.
            dimension_semantics=("parallel",),
            # 48 MiB leaves headroom on v7x (64 MiB physical) and is well
            # within v5e/v6e (128 MiB physical); raise on v6e for huge tiles.
            vmem_limit_bytes=48 * 1024 * 1024,
        ),
    )(phases, w_fold, shift_c, scale_p, shift_p)

    # (N_pad, Cout, Ho*Wo) -> (N, Cout, Ho, Wo): metadata-only reshape.
    return out[:N].reshape(N, Cout, Ho, Wo)


def _reference(x, w, b, gamma, beta, mean, var, eps=1e-5):
    conv = lax.conv_general_dilated(
        x, w, window_strides=(2, 2), padding=((1, 1), (1, 1)),
        dimension_numbers=("NCHW", "OIHW", "NCHW")) + b.reshape(1, -1, 1, 1)
    pool = lax.reduce_window(x, -jnp.inf, lax.max,
                             (1, 1, 2, 2), (1, 1, 2, 2), "VALID")
    y = jnp.concatenate([conv, pool], axis=1)
    c = lambda v: v.reshape(1, -1, 1, 1)
    y = (y - c(mean)) / jnp.sqrt(c(var) + eps) * c(gamma) + c(beta)
    return jnp.maximum(y, 0.0)


if __name__ == "__main__":
    N, Cin, H, W = 2, 4, 16, 16
    Cout = 8
    Cconv = Cout - Cin          # ninput < noutput branch

    key = jax.random.PRNGKey(0)
    kx, kw, kb, kg, kbe, km, kv = jax.random.split(key, 7)

    x = jax.random.normal(kx, (N, Cin, H, W), jnp.float32)
    conv_w = jax.random.normal(kw, (Cconv, Cin, 3, 3), jnp.float32) * 0.1
    conv_b = jax.random.normal(kb, (Cconv,), jnp.float32) * 0.1
    gamma = 1.0 + 0.1 * jax.random.normal(kg, (Cout,), jnp.float32)
    beta = 0.1 * jax.random.normal(kbe, (Cout,), jnp.float32)
    run_mean = 0.1 * jax.random.normal(km, (Cout,), jnp.float32)
    run_var = jax.random.uniform(kv, (Cout,), jnp.float32, 0.5, 1.5)

    out = downsampler_block(x, conv_w, conv_b, gamma, beta, run_mean, run_var)
    out = jax.block_until_ready(out)

    ref = _reference(x, conv_w, conv_b, gamma, beta, run_mean, run_var)
    assert out.shape == (N, Cout, H // 2, W // 2)
    # bf16 GEMM / pool inputs (f32 accumulation) -> slightly looser tolerance.
    assert jnp.allclose(out, ref, atol=3e-2, rtol=3e-2)

    print("KERNEL_OK")
</pallas_src>

<mosaic_0001>
module attributes {stable_mosaic.version = 11 : i64} {
  func.func @kernel(%arg0: i32, %arg1: memref<2x4x4x64xbf16, #tpu.memory_space<vmem>>, %arg2: memref<4x36xbf16, #tpu.memory_space<vmem>>, %arg3: memref<4x1xf32, #tpu.memory_space<vmem>>, %arg4: memref<4x1xf32, #tpu.memory_space<vmem>>, %arg5: memref<4x1xf32, #tpu.memory_space<vmem>>, %arg6: memref<2x8x64xf32, #tpu.memory_space<vmem>>) attributes {dimension_semantics = [#tpu.dimension_semantics<parallel>], iteration_bounds = array<i64: 1>, scalar_prefetch = 0 : i64, scratch_operands = 0 : i64, tpu.core_type = #tpu.core_type<tc>, window_params = [{transform_indices = @transform_0, window_bounds = array<i64: 2, 4, 4, 64>}, {pipeline_mode = #tpu.pipeline_mode<synchronous>, transform_indices = @transform_1, window_bounds = array<i64: 4, 36>}, {pipeline_mode = #tpu.pipeline_mode<synchronous>, transform_indices = @transform_2, window_bounds = array<i64: 4, 1>}, {pipeline_mode = #tpu.pipeline_mode<synchronous>, transform_indices = @transform_3, window_bounds = array<i64: 4, 1>}, {pipeline_mode = #tpu.pipeline_mode<synchronous>, transform_indices = @transform_4, window_bounds = array<i64: 4, 1>}, {transform_indices = @transform_5, window_bounds = array<i64: 2, 8, 64>}]} {
    %0 = tpu.iota {dimensions = array<i32: 1>} : vector<1x64xi32>
    %c8_i32 = arith.constant 8 : i32
    %c0_i32 = arith.constant 0 : i32
    %1 = arith.cmpi eq, %c8_i32, %c0_i32 : i32
    %c1_i32 = arith.constant 1 : i32
    %2 = arith.select %1, %c1_i32, %c8_i32 : i32
    %3 = vector.broadcast %2 : i32 to vector<1x64xi32>
    %4 = arith.remsi %0, %3 : vector<1x64xi32>
    %c0_i32_0 = arith.constant 0 : i32
    %5 = vector.broadcast %c0_i32_0 : i32 to vector<1x64xi32>
    %6 = arith.cmpi ne, %4, %5 : vector<1x64xi32>
    %c0_i32_1 = arith.constant 0 : i32
    %7 = vector.broadcast %c0_i32_1 : i32 to vector<1x64xi32>
    %8 = arith.cmpi slt, %4, %7 : vector<1x64xi32>
    %c0_i32_2 = arith.constant 0 : i32
    %9 = arith.cmpi slt, %2, %c0_i32_2 : i32
    %10 = vector.broadcast %9 : i1 to vector<1x64xi1>
    %11 = vector.broadcast %10 : vector<1x64xi1> to vector<1x64xi1>
    %12 = arith.xori %8, %11 : vector<1x64xi1>
    %13 = arith.andi %12, %6 : vector<1x64xi1>
    %14 = vector.broadcast %2 : i32 to vector<1x64xi32>
    %15 = arith.addi %4, %14 : vector<1x64xi32>
    %16 = arith.select %13, %15, %4 : vector<1x64xi1>, vector<1x64xi32>
    %c0_i32_3 = arith.constant 0 : i32
    %17 = vector.broadcast %c0_i32_3 : i32 to vector<1x64xi32>
    %18 = arith.cmpi ne, %16, %17 : vector<1x64xi32>
    %c0 = arith.constant 0 : index
    %c0_4 = arith.constant 0 : index
    %19 = vector.load %arg2[%c0, %c0_4] : memref<4x36xbf16, #tpu.memory_space<vmem>>, vector<4x36xbf16>
    %c0_5 = arith.constant 0 : index
    %c0_6 = arith.constant 0 : index
    %20 = vector.load %arg3[%c0_5, %c0_6] : memref<4x1xf32, #tpu.memory_space<vmem>>, vector<4x1xf32>
    %c0_7 = arith.constant 0 : index
    %c0_8 = arith.constant 0 : index
    %21 = vector.load %arg4[%c0_7, %c0_8] : memref<4x1xf32, #tpu.memory_space<vmem>>, vector<4x1xf32>
    %c0_9 = arith.constant 0 : index
    %c0_10 = arith.constant 0 : index
    %22 = vector.load %arg5[%c0_9, %c0_10] : memref<4x1xf32, #tpu.memory_space<vmem>>, vector<4x1xf32>
    %c0_11 = arith.constant 0 : index
    %c0_12 = arith.constant 0 : index
    %c0_13 = arith.constant 0 : index
    %c0_14 = arith.constant 0 : index
    %23 = vector.load %arg1[%c0_11, %c0_12, %c0_13, %c0_14] : memref<2x4x4x64xbf16, #tpu.memory_space<vmem>>, vector<1x4x4x64xbf16>
    %24 = vector.shape_cast %23 : vector<1x4x4x64xbf16> to vector<4x4x64xbf16>
    %25 = vector.extract_strided_slice %24 {offsets = [3, 0, 0], sizes = [1, 4, 64], strides = [1, 1, 1]} : vector<4x4x64xbf16> to vector<1x4x64xbf16>
    %26 = vector.shape_cast %25 : vector<1x4x64xbf16> to vector<4x64xbf16>
    %cst = arith.constant 0.000000e+00 : bf16
    %27 = vector.broadcast %cst : bf16 to vector<4x9xbf16>
    %28 = vector.extract_strided_slice %26 {offsets = [0, 0], sizes = [4, 55], strides = [1, 1]} : vector<4x64xbf16> to vector<4x55xbf16>
    %29 = tpu.concatenate %27, %28 in 1 : vector<4x9xbf16>, vector<4x55xbf16> -> vector<4x64xbf16>
    %c0_i32_15 = arith.constant 0 : i32
    %30 = arith.sitofp %c0_i32_15 : i32 to bf16
    %31 = vector.shape_cast %18 : vector<1x64xi1> to vector<1x64xi1>
    %32 = vector.broadcast %31 : vector<1x64xi1> to vector<4x64xi1>
    %33 = vector.broadcast %30 : bf16 to vector<4x64xbf16>
    %34 = arith.select %32, %29, %33 : vector<4x64xi1>, vector<4x64xbf16>
    %35 = vector.extract_strided_slice %24 {offsets = [2, 0, 0], sizes = [1, 4, 64], strides = [1, 1, 1]} : vector<4x4x64xbf16> to vector<1x4x64xbf16>
    %36 = vector.shape_cast %35 : vector<1x4x64xbf16> to vector<4x64xbf16>
    %cst_16 = arith.constant 0.000000e+00 : bf16
    %37 = vector.broadcast %cst_16 : bf16 to vector<4x8xbf16>
    %38 = vector.extract_strided_slice %36 {offsets = [0, 0], sizes = [4, 56], strides = [1, 1]} : vector<4x64xbf16> to vector<4x56xbf16>
    %39 = tpu.concatenate %37, %38 in 1 : vector<4x8xbf16>, vector<4x56xbf16> -> vector<4x64xbf16>
    %40 = vector.extract_strided_slice %24 {offsets = [3, 0, 0], sizes = [1, 4, 64], strides = [1, 1, 1]} : vector<4x4x64xbf16> to vector<1x4x64xbf16>
    %41 = vector.shape_cast %40 : vector<1x4x64xbf16> to vector<4x64xbf16>
    %cst_17 = arith.constant 0.000000e+00 : bf16
    %42 = vector.broadcast %cst_17 : bf16 to vector<4x8xbf16>
    %43 = vector.extract_strided_slice %41 {offsets = [0, 0], sizes = [4, 56], strides = [1, 1]} : vector<4x64xbf16> to vector<4x56xbf16>
    %44 = tpu.concatenate %42, %43 in 1 : vector<4x8xbf16>, vector<4x56xbf16> -> vector<4x64xbf16>
    %45 = vector.extract_strided_slice %24 {offsets = [1, 0, 0], sizes = [1, 4, 64], strides = [1, 1, 1]} : vector<4x4x64xbf16> to vector<1x4x64xbf16>
    %46 = vector.shape_cast %45 : vector<1x4x64xbf16> to vector<4x64xbf16>
    %cst_18 = arith.constant 0.000000e+00 : bf16
    %47 = vector.broadcast %cst_18 : bf16 to vector<4x1xbf16>
    %48 = vector.extract_strided_slice %46 {offsets = [0, 0], sizes = [4, 63], strides = [1, 1]} : vector<4x64xbf16> to vector<4x63xbf16>
    %49 = tpu.concatenate %47, %48 in 1 : vector<4x1xbf16>, vector<4x63xbf16> -> vector<4x64xbf16>
    %c0_i32_19 = arith.constant 0 : i32
    %50 = arith.sitofp %c0_i32_19 : i32 to bf16
    %51 = vector.shape_cast %18 : vector<1x64xi1> to vector<1x64xi1>
    %52 = vector.broadcast %51 : vector<1x64xi1> to vector<4x64xi1>
    %53 = vector.broadcast %50 : bf16 to vector<4x64xbf16>
    %54 = arith.select %52, %49, %53 : vector<4x64xi1>, vector<4x64xbf16>
    %55 = vector.extract_strided_slice %24 {offsets = [0, 0, 0], sizes = [1, 4, 64], strides = [1, 1, 1]} : vector<4x4x64xbf16> to vector<1x4x64xbf16>
    %56 = vector.shape_cast %55 : vector<1x4x64xbf16> to vector<4x64xbf16>
    %57 = vector.extract_strided_slice %24 {offsets = [1, 0, 0], sizes = [1, 4, 64], strides = [1, 1, 1]} : vector<4x4x64xbf16> to vector<1x4x64xbf16>
    %58 = vector.shape_cast %57 : vector<1x4x64xbf16> to vector<4x64xbf16>
    %59 = vector.extract_strided_slice %24 {offsets = [3, 0, 0], sizes = [1, 4, 64], strides = [1, 1, 1]} : vector<4x4x64xbf16> to vector<1x4x64xbf16>
    %60 = vector.shape_cast %59 : vector<1x4x64xbf16> to vector<4x64xbf16>
    %cst_20 = arith.constant 0.000000e+00 : bf16
    %61 = vector.broadcast %cst_20 : bf16 to vector<4x1xbf16>
    %62 = vector.extract_strided_slice %60 {offsets = [0, 0], sizes = [4, 63], strides = [1, 1]} : vector<4x64xbf16> to vector<4x63xbf16>
    %63 = tpu.concatenate %61, %62 in 1 : vector<4x1xbf16>, vector<4x63xbf16> -> vector<4x64xbf16>
    %c0_i32_21 = arith.constant 0 : i32
    %64 = arith.sitofp %c0_i32_21 : i32 to bf16
    %65 = vector.shape_cast %18 : vector<1x64xi1> to vector<1x64xi1>
    %66 = vector.broadcast %65 : vector<1x64xi1> to vector<4x64xi1>
    %67 = vector.broadcast %64 : bf16 to vector<4x64xbf16>
    %68 = arith.select %66, %63, %67 : vector<4x64xi1>, vector<4x64xbf16>
    %69 = vector.extract_strided_slice %24 {offsets = [2, 0, 0], sizes = [1, 4, 64], strides = [1, 1, 1]} : vector<4x4x64xbf16> to vector<1x4x64xbf16>
    %70 = vector.shape_cast %69 : vector<1x4x64xbf16> to vector<4x64xbf16>
    %71 = vector.extract_strided_slice %24 {offsets = [3, 0, 0], sizes = [1, 4, 64], strides = [1, 1, 1]} : vector<4x4x64xbf16> to vector<1x4x64xbf16>
    %72 = vector.shape_cast %71 : vector<1x4x64xbf16> to vector<4x64xbf16>
    %73 = tpu.concatenate %34, %39, %44, %54, %56, %58, %68, %70, %72 in 0 : vector<4x64xbf16>, vector<4x64xbf16>, vector<4x64xbf16>, vector<4x64xbf16>, vector<4x64xbf16>, vector<4x64xbf16>, vector<4x64xbf16>, vector<4x64xbf16>, vector<4x64xbf16> -> vector<36x64xbf16>
    %cst_22 = arith.constant dense<0.000000e+00> : vector<4x64xf32>
    %74 = tpu.matmul %19, %73, %cst_22 {dimension_numbers = #tpu.dot_dimension_numbers<[1], [0], [0], [1], [0, 0, 1, 1], [], []>} : vector<4x36xbf16>, vector<36x64xbf16>, vector<4x64xf32> -> vector<4x64xf32>
    %75 = vector.broadcast %20 : vector<4x1xf32> to vector<4x64xf32>
    %76 = arith.addf %74, %75 : vector<4x64xf32>
    %cst_23 = arith.constant 0.000000e+00 : f32
    %77 = vector.broadcast %cst_23 : f32 to vector<4x64xf32>
    %78 = arith.maximumf %76, %77 : vector<4x64xf32>
    %cst_24 = arith.constant dense<0xFF80> : vector<4x64xbf16>
    %79 = vector.multi_reduction <maximumf>, %24, %cst_24 [0] : vector<4x4x64xbf16> to vector<4x64xbf16>
    %80 = arith.extf %79 : vector<4x64xbf16> to vector<4x64xf32>
    %81 = vector.broadcast %21 : vector<4x1xf32> to vector<4x64xf32>
    %82 = arith.mulf %80, %81 : vector<4x64xf32>
    %83 = vector.broadcast %22 : vector<4x1xf32> to vector<4x64xf32>
    %84 = arith.addf %82, %83 : vector<4x64xf32>
    %cst_25 = arith.constant 0.000000e+00 : f32
    %85 = vector.broadcast %cst_25 : f32 to vector<4x64xf32>
    %86 = arith.maximumf %84, %85 : vector<4x64xf32>
    %87 = tpu.concatenate %78, %86 in 0 : vector<4x64xf32>, vector<4x64xf32> -> vector<8x64xf32>
    %c0_26 = arith.constant 0 : index
    %c0_27 = arith.constant 0 : index
    %c0_28 = arith.constant 0 : index
    %88 = vector.load %arg6[%c0_26, %c0_27, %c0_28] : memref<2x8x64xf32, #tpu.memory_space<vmem>>, vector<1x8x64xf32>
    %89 = vector.shape_cast %88 : vector<1x8x64xf32> to vector<8x64xf32>
    %90 = vector.shape_cast %87 : vector<8x64xf32> to vector<1x8x64xf32>
    tpu.vector_store %arg6[%c0_26, %c0_27, %c0_28], %90 {strides = array<i32>} : memref<2x8x64xf32, #tpu.memory_space<vmem>>, vector<1x8x64xf32>,
    %c1 = arith.constant 1 : index
    %c0_29 = arith.constant 0 : index
    %c0_30 = arith.constant 0 : index
    %c0_31 = arith.constant 0 : index
    %91 = vector.load %arg1[%c1, %c0_29, %c0_30, %c0_31] : memref<2x4x4x64xbf16, #tpu.memory_space<vmem>>, vector<1x4x4x64xbf16>
    %92 = vector.shape_cast %91 : vector<1x4x4x64xbf16> to vector<4x4x64xbf16>
    %93 = vector.extract_strided_slice %92 {offsets = [3, 0, 0], sizes = [1, 4, 64], strides = [1, 1, 1]} : vector<4x4x64xbf16> to vector<1x4x64xbf16>
    %94 = vector.shape_cast %93 : vector<1x4x64xbf16> to vector<4x64xbf16>
    %cst_32 = arith.constant 0.000000e+00 : bf16
    %95 = vector.broadcast %cst_32 : bf16 to vector<4x9xbf16>
    %96 = vector.extract_strided_slice %94 {offsets = [0, 0], sizes = [4, 55], strides = [1, 1]} : vector<4x64xbf16> to vector<4x55xbf16>
    %97 = tpu.concatenate %95, %96 in 1 : vector<4x9xbf16>, vector<4x55xbf16> -> vector<4x64xbf16>
    %c0_i32_33 = arith.constant 0 : i32
    %98 = arith.sitofp %c0_i32_33 : i32 to bf16
    %99 = vector.shape_cast %18 : vector<1x64xi1> to vector<1x64xi1>
    %100 = vector.broadcast %99 : vector<1x64xi1> to vector<4x64xi1>
    %101 = vector.broadcast %98 : bf16 to vector<4x64xbf16>
    %102 = arith.select %100, %97, %101 : vector<4x64xi1>, vector<4x64xbf16>
    %103 = vector.extract_strided_slice %92 {offsets = [2, 0, 0], sizes = [1, 4, 64], strides = [1, 1, 1]} : vector<4x4x64xbf16> to vector<1x4x64xbf16>
    %104 = vector.shape_cast %103 : vector<1x4x64xbf16> to vector<4x64xbf16>
    %cst_34 = arith.constant 0.000000e+00 : bf16
    %105 = vector.broadcast %cst_34 : bf16 to vector<4x8xbf16>
    %106 = vector.extract_strided_slice %104 {offsets = [0, 0], sizes = [4, 56], strides = [1, 1]} : vector<4x64xbf16> to vector<4x56xbf16>
    %107 = tpu.concatenate %105, %106 in 1 : vector<4x8xbf16>, vector<4x56xbf16> -> vector<4x64xbf16>
    %108 = vector.extract_strided_slice %92 {offsets = [3, 0, 0], sizes = [1, 4, 64], strides = [1, 1, 1]} : vector<4x4x64xbf16> to vector<1x4x64xbf16>
    %109 = vector.shape_cast %108 : vector<1x4x64xbf16> to vector<4x64xbf16>
    %cst_35 = arith.constant 0.000000e+00 : bf16
    %110 = vector.broadcast %cst_35 : bf16 to vector<4x8xbf16>
    %111 = vector.extract_strided_slice %109 {offsets = [0, 0], sizes = [4, 56], strides = [1, 1]} : vector<4x64xbf16> to vector<4x56xbf16>
    %112 = tpu.concatenate %110, %111 in 1 : vector<4x8xbf16>, vector<4x56xbf16> -> vector<4x64xbf16>
    %113 = vector.extract_strided_slice %92 {offsets = [1, 0, 0], sizes = [1, 4, 64], strides = [1, 1, 1]} : vector<4x4x64xbf16> to vector<1x4x64xbf16>
    %114 = vector.shape_cast %113 : vector<1x4x64xbf16> to vector<4x64xbf16>
    %cst_36 = arith.constant 0.000000e+00 : bf16
    %115 = vector.broadcast %cst_36 : bf16 to vector<4x1xbf16>
    %116 = vector.extract_strided_slice %114 {offsets = [0, 0], sizes = [4, 63], strides = [1, 1]} : vector<4x64xbf16> to vector<4x63xbf16>
    %117 = tpu.concatenate %115, %116 in 1 : vector<4x1xbf16>, vector<4x63xbf16> -> vector<4x64xbf16>
    %c0_i32_37 = arith.constant 0 : i32
    %118 = arith.sitofp %c0_i32_37 : i32 to bf16
    %119 = vector.shape_cast %18 : vector<1x64xi1> to vector<1x64xi1>
    %120 = vector.broadcast %119 : vector<1x64xi1> to vector<4x64xi1>
    %121 = vector.broadcast %118 : bf16 to vector<4x64xbf16>
    %122 = arith.select %120, %117, %121 : vector<4x64xi1>, vector<4x64xbf16>
    %123 = vector.extract_strided_slice %92 {offsets = [0, 0, 0], sizes = [1, 4, 64], strides = [1, 1, 1]} : vector<4x4x64xbf16> to vector<1x4x64xbf16>
    %124 = vector.shape_cast %123 : vector<1x4x64xbf16> to vector<4x64xbf16>
    %125 = vector.extract_strided_slice %92 {offsets = [1, 0, 0], sizes = [1, 4, 64], strides = [1, 1, 1]} : vector<4x4x64xbf16> to vector<1x4x64xbf16>
    %126 = vector.shape_cast %125 : vector<1x4x64xbf16> to vector<4x64xbf16>
    %127 = vector.extract_strided_slice %92 {offsets = [3, 0, 0], sizes = [1, 4, 64], strides = [1, 1, 1]} : vector<4x4x64xbf16> to vector<1x4x64xbf16>
    %128 = vector.shape_cast %127 : vector<1x4x64xbf16> to vector<4x64xbf16>
    %cst_38 = arith.constant 0.000000e+00 : bf16
    %129 = vector.broadcast %cst_38 : bf16 to vector<4x1xbf16>
    %130 = vector.extract_strided_slice %128 {offsets = [0, 0], sizes = [4, 63], strides = [1, 1]} : vector<4x64xbf16> to vector<4x63xbf16>
    %131 = tpu.concatenate %129, %130 in 1 : vector<4x1xbf16>, vector<4x63xbf16> -> vector<4x64xbf16>
    %c0_i32_39 = arith.constant 0 : i32
    %132 = arith.sitofp %c0_i32_39 : i32 to bf16
    %133 = vector.shape_cast %18 : vector<1x64xi1> to vector<1x64xi1>
    %134 = vector.broadcast %133 : vector<1x64xi1> to vector<4x64xi1>
    %135 = vector.broadcast %132 : bf16 to vector<4x64xbf16>
    %136 = arith.select %134, %131, %135 : vector<4x64xi1>, vector<4x64xbf16>
    %137 = vector.extract_strided_slice %92 {offsets = [2, 0, 0], sizes = [1, 4, 64], strides = [1, 1, 1]} : vector<4x4x64xbf16> to vector<1x4x64xbf16>
    %138 = vector.shape_cast %137 : vector<1x4x64xbf16> to vector<4x64xbf16>
    %139 = vector.extract_strided_slice %92 {offsets = [3, 0, 0], sizes = [1, 4, 64], strides = [1, 1, 1]} : vector<4x4x64xbf16> to vector<1x4x64xbf16>
    %140 = vector.shape_cast %139 : vector<1x4x64xbf16> to vector<4x64xbf16>
    %141 = tpu.concatenate %102, %107, %112, %122, %124, %126, %136, %138, %140 in 0 : vector<4x64xbf16>, vector<4x64xbf16>, vector<4x64xbf16>, vector<4x64xbf16>, vector<4x64xbf16>, vector<4x64xbf16>, vector<4x64xbf16>, vector<4x64xbf16>, vector<4x64xbf16> -> vector<36x64xbf16>
    %cst_40 = arith.constant dense<0.000000e+00> : vector<4x64xf32>
    %142 = tpu.matmul %19, %141, %cst_40 {dimension_numbers = #tpu.dot_dimension_numbers<[1], [0], [0], [1], [0, 0, 1, 1], [], []>} : vector<4x36xbf16>, vector<36x64xbf16>, vector<4x64xf32> -> vector<4x64xf32>
    %143 = vector.broadcast %20 : vector<4x1xf32> to vector<4x64xf32>
    %144 = arith.addf %142, %143 : vector<4x64xf32>
    %cst_41 = arith.constant 0.000000e+00 : f32
    %145 = vector.broadcast %cst_41 : f32 to vector<4x64xf32>
    %146 = arith.maximumf %144, %145 : vector<4x64xf32>
    %cst_42 = arith.constant dense<0xFF80> : vector<4x64xbf16>
    %147 = vector.multi_reduction <maximumf>, %92, %cst_42 [0] : vector<4x4x64xbf16> to vector<4x64xbf16>
    %148 = arith.extf %147 : vector<4x64xbf16> to vector<4x64xf32>
    %149 = vector.broadcast %21 : vector<4x1xf32> to vector<4x64xf32>
    %150 = arith.mulf %148, %149 : vector<4x64xf32>
    %151 = vector.broadcast %22 : vector<4x1xf32> to vector<4x64xf32>
    %152 = arith.addf %150, %151 : vector<4x64xf32>
    %cst_43 = arith.constant 0.000000e+00 : f32
    %153 = vector.broadcast %cst_43 : f32 to vector<4x64xf32>
    %154 = arith.maximumf %152, %153 : vector<4x64xf32>
    %155 = tpu.concatenate %146, %154 in 0 : vector<4x64xf32>, vector<4x64xf32> -> vector<8x64xf32>
    %c1_44 = arith.constant 1 : index
    %c0_45 = arith.constant 0 : index
    %c0_46 = arith.constant 0 : index
    %156 = vector.load %arg6[%c1_44, %c0_45, %c0_46] : memref<2x8x64xf32, #tpu.memory_space<vmem>>, vector<1x8x64xf32>
    %157 = vector.shape_cast %156 : vector<1x8x64xf32> to vector<8x64xf32>
    %158 = vector.shape_cast %155 : vector<8x64xf32> to vector<1x8x64xf32>
    tpu.vector_store %arg6[%c1_44, %c0_45, %c0_46], %158 {strides = array<i32>} : memref<2x8x64xf32, #tpu.memory_space<vmem>>, vector<1x8x64xf32>,
    return
  }
  func.func @transform_0(%arg0: i32) -> (i32, i32, i32, i32) {
    %c0_i32 = arith.constant 0 : i32
    %c0_i32_0 = arith.constant 0 : i32
    %c0_i32_1 = arith.constant 0 : i32
    %c0_i32_2 = arith.constant 0 : i32
    return %arg0, %c0_i32, %c0_i32_0, %c0_i32_1 : i32, i32, i32, i32
  }
  func.func @transform_1(%arg0: i32) -> (i32, i32) {
    %c0_i32 = arith.constant 0 : i32
    %c0_i32_0 = arith.constant 0 : i32
    %c0_i32_1 = arith.constant 0 : i32
    return %c0_i32, %c0_i32_0 : i32, i32
  }
  func.func @transform_2(%arg0: i32) -> (i32, i32) {
    %c0_i32 = arith.constant 0 : i32
    %c0_i32_0 = arith.constant 0 : i32
    %c0_i32_1 = arith.constant 0 : i32
    return %c0_i32, %c0_i32_0 : i32, i32
  }
  func.func @transform_3(%arg0: i32) -> (i32, i32) {
    %c0_i32 = arith.constant 0 : i32
    %c0_i32_0 = arith.constant 0 : i32
    %c0_i32_1 = arith.constant 0 : i32
    return %c0_i32, %c0_i32_0 : i32, i32
  }
  func.func @transform_4(%arg0: i32) -> (i32, i32) {
    %c0_i32 = arith.constant 0 : i32
    %c0_i32_0 = arith.constant 0 : i32
    %c0_i32_1 = arith.constant 0 : i32
    return %c0_i32, %c0_i32_0 : i32, i32
  }
  func.func @transform_5(%arg0: i32) -> (i32, i32, i32) {
    %c0_i32 = arith.constant 0 : i32
    %c0_i32_0 = arith.constant 0 : i32
    %c0_i32_1 = arith.constant 0 : i32
    return %arg0, %c0_i32, %c0_i32_0 : i32, i32, i32
  }
}

</mosaic_0001>

<llo_original>
// kernel: tpu_custom_call.1
$region0: #{tpu_custom_call.1}
  #allocation0 [shape = 'u32[]', space=smem, size = 0x4, offset = 0x4, fixed_abs, tag = 'smem constant byte address 0x4 - core index']
  #allocation1 [shape = 'u32[144,128]{1,0:T(1,128)}', space=vmem, size = 0x12000, scoped, tag = 'internal scratch']
  %s0 = inlined_call_operand.hbm [shape: bf16[2,4,4,64], index: 0, kind: input, shape index: {}]
  %s1 = inlined_call_operand.vmem [shape: bf16[4,36], index: 1, kind: input, shape index: {}]
  %s2 = inlined_call_operand.vmem [shape: f32[4,1], index: 2, kind: input, shape index: {}]
  %s3 = inlined_call_operand.vmem [shape: f32[4,1], index: 3, kind: input, shape index: {}]
  %s4 = inlined_call_operand.vmem [shape: f32[4,1], index: 4, kind: input, shape index: {}]
  %s5 = inlined_call_operand.hbm [shape: f32[2,8,64], index: 5, kind: output, shape index: {}]
  %s6 = sld [smem:[#allocation0]]
  $region34: #{tpu_custom_call.1} parent=0
    _
  %s8 = ssub.s32 1, %s6
  %s9 = scalar_select 0, %s8, %s6
  $region1: #{tpu_custom_call.1} parent=0
    #allocation2 [shape = 'u8[8192]{0}', space=vmem, size = 0x2000, scoped, tag = 'input window, operand 0, single buffered']
    #allocation3 [shape = 's32[1]{0}', space=sflag, size = 0x4, scoped, tag = 'scoped memory for tpu_custom_call.1']
    #allocation4 [shape = 's32[1]{0}', space=sflag, size = 0x4, scoped, tag = 'scoped memory for tpu_custom_call.1']
    #allocation5 [shape = 'u8[8192]{0}', space=vmem, size = 0x2000, scoped, tag = 'output window, operand 0, single buffered']
    %10 = vsyncpa [#allocation3], 0
    %11 = vsyncpa [#allocation4], 0
    // Predicated region
    $region2: #{tpu_custom_call.1} parent=1 // pred_check
      _
    $region3: #{tpu_custom_call.1} parent=1 // pred_check_branch
      %13 = sbr.rel (0) target = $region5
    $region4: #{tpu_custom_call.1} parent=1 // pred_region
      %s15 = ssub.s32 256, 256
      %16 = vsyncadd [#allocation3], %s15
      %s17 = sshll.u32 [#allocation2], 4
      %s18 = int_to_ptr.vmem [resolvable:$true] %s17
      %23 = dma.hbm_to_vmem [thread:$0]  %s0, 256, %s18, [#allocation3], 32, 32, 2
    $region5: #{tpu_custom_call.1} parent=1 // pred_fallthru
      _
    // Predicated region
    $region6: #{tpu_custom_call.1} parent=1 // pred_check
      _
    $region7: #{tpu_custom_call.1} parent=1 // pred_check_branch
      %25 = sbr.rel (0) target = $region9
    $region8: #{tpu_custom_call.1} parent=1 // pred_region
      _
    $region9: #{tpu_custom_call.1} parent=1 // pred_fallthru
      _
    // Predicated region
    $region10: #{tpu_custom_call.1} parent=1 // pred_check
      _
    $region11: #{tpu_custom_call.1} parent=1 // pred_check_branch
      %27 = sbr.rel (0) target = $region13
    $region12: #{tpu_custom_call.1} parent=1 // pred_region
      _
    $region13: #{tpu_custom_call.1} parent=1 // pred_fallthru
      _
    // Predicated region
    $region14: #{tpu_custom_call.1} parent=1 // pred_check
      _
    $region15: #{tpu_custom_call.1} parent=1 // pred_check_branch
      %29 = sbr.rel (0) target = $region17
    $region16: #{tpu_custom_call.1} parent=1 // pred_region
      _
    $region17: #{tpu_custom_call.1} parent=1 // pred_fallthru
      _
    // Predicated region
    $region18: #{tpu_custom_call.1} parent=1 // pred_check
      _
    $region19: #{tpu_custom_call.1} parent=1 // pred_check_branch
      %31 = sbr.rel (0) target = $region21
    $region20: #{tpu_custom_call.1} parent=1 // pred_region
      _
    $region21: #{tpu_custom_call.1} parent=1 // pred_fallthru
      _
    // Predicated region
    $region22: #{tpu_custom_call.1} parent=1 // pred_check
      _
    $region23: #{tpu_custom_call.1} parent=1 // pred_check_branch
      %33 = sbr.rel (0) target = $region25
    $region24: #{tpu_custom_call.1} parent=1 // pred_region
      %34 = dma.done [#allocation3], 256
    $region25: #{tpu_custom_call.1} parent=1 // pred_fallthru
      _
    %v37 = vlaneseq
    %v38 = vand.u32 %v37, 127
    %vm39 = vcmp.lt.s32.totalorder %v38, 0
    %v40 = vsub.s32 0, %v38
    %v41 = vsel %vm39, %v40, %v38
    %v42 = vshrl.u32 %v41, 3
    %v43 = vand.u32 %v41, 7
    %v44 = vsub.s32 0, %v43
    %v45 = vsel %vm39, %v44, %v43
    %vm46 = vcmp.ne.s32.totalorder %v45, 0
    %vm47 = vcmp.lt.s32.totalorder %v45, 0
    %vm48 = vmand %vm47, %vm46
    %v49 = vadd.s32 %v45, 8
    %v50 = vsel %vm48, %v49, %v45
    %vm51 = vcmp.ne.s32.totalorder %v50, 0
    %v52 = vld [vmem:[%s1] sm:$0x3]
    %v53 = vld [vmem:[%s2] sm:$0xf]
    %v54 = vld [vmem:[%s3] sm:$0xf]
    %v55 = vld [vmem:[%s4] sm:$0xf]
    %v56 = vld [vmem:[#allocation2] sm:$0x3]
    %v57 = vld [vmem:[#allocation2 + $0x2] sm:$0x3]
    %v58 = vld [vmem:[#allocation2 + $0x4] sm:$0x3]
    %v59 = vld [vmem:[#allocation2 + $0x6] sm:$0x3]
    %v62 = vunpack.c.l.s4 1983009808
    %v63 = vunpack.c.0.s8 %v62
    %v64 = vlaneseq
    %v65 = vshrl.u32 %v64, 7
    %v66 = vsub.s32 %v63, %v65
    %v67 = vrot.slane %v59, %v66
    %68 = vrot.lane.b32.xlu0 %v67, 9
    %v69 = vpop.permute.xlu0 %68
    %vm70 = vcmask 72704
    %v73 = vsel %vm70, 0, %v69
    %v75 = vsel %vm51, 1, 0
    %vm76 = vcmp.eq.s32.totalorder %v75, 1
    %vm77 = vmpackc.low %vm76, %vm76
    %v78 = vsel %vm77, %v73, 0
    %v81 = vunpack.c.l.s4 1983009808
    %v82 = vunpack.c.0.s8 %v81
    %v83 = vlaneseq
    %v84 = vshrl.u32 %v83, 7
    %v85 = vsub.s32 %v82, %v84
    %v86 = vrot.slane %v58, %v85
    %87 = vrot.lane.b32.xlu0 %v86, 8
    %v88 = vpop.permute.xlu0 %87
    %vm89 = vcmask 64512
    %v91 = vsel %vm89, 0, %v88
    %92 = vrot.lane.b32.xlu0 %v67, 8
    %v93 = vpop.permute.xlu0 %92
    %v95 = vsel %vm89, 0, %v93
    %v98 = vunpack.c.l.s4 1983009808
    %v99 = vunpack.c.0.s8 %v98
    %v100 = vlaneseq
    %v101 = vshrl.u32 %v100, 7
    %v102 = vsub.s32 %v99, %v101
    %v103 = vrot.slane %v57, %v102
    %104 = vrot.lane.b32.xlu0 %v103, 1
    %v105 = vpop.permute.xlu0 %104
    %vm106 = vcmask 7168
    %v108 = vsel %vm106, 0, %v105
    %v110 = vsel %vm77, %v108, 0
    %111 = vrot.lane.b32.xlu0 %v67, 1
    %v112 = vpop.permute.xlu0 %111
    %v114 = vsel %vm106, 0, %v112
    %v116 = vsel %vm77, %v114, 0
    %v118 = vrot.slane %v91, 6
    %v120 = vrot.slane %v95, 4
    %v122 = vrot.slane %v110, 2
    %v123 = vcombine.low %v57, %v57
    %v125 = vunpack.c.l.s4 1983009808
    %v126 = vunpack.c.0.s8 %v125
    %v127 = vlaneseq
    %v128 = vshrl.u32 %v127, 7
    %v129 = vsub.s32 %v126, %v128
    %v130 = vrot.slane %v123, %v129
    %v132 = vrot.slane %v116, 4
    %v133 = vcombine.low %v58, %v58
    %v135 = vunpack.c.l.s4 1983009808
    %v136 = vunpack.c.0.s8 %v135
    %v137 = vlaneseq
    %v138 = vshrl.u32 %v137, 7
    %v139 = vsub.s32 %v136, %v138
    %v140 = vrot.slane %v133, %v139
    %v141 = vcombine.low %v140, %v140
    %vm142 = vcmask 1041408
    %v145 = vsel %vm142, %v78, %v118
    %vm146 = vcmask 1043456
    %v148 = vsel %vm146, %v145, %v120
    %vm149 = vcmask 1045504
    %v151 = vsel %vm149, %v148, %v122
    %v155 = vsel %vm142, %v56, %v130
    %v157 = vsel %vm146, %v155, %v132
    %v159 = vsel %vm149, %v157, %v141
    %162 = vset.pattern.permute.xlu0 0
    %163 = vperm.xlu0 %162, %v53
    %v164 = vpop.permute.xlu0 %163
    %vm166 = vcmask 293888
    %v168 = vsel %vm166, %v52, 0
    %v171 = vsel %vm142, %v59, 0
    %173 = vmatprep.subr.bf16.mxu0 0
    %174 = vmatpush1.bf16.msra.mxu0 %v151
    %175 = vmatprep.subr.bf16.mxu0 0
    %176 = vmatpush1.bf16.msra.mxu0 %v159
    %177 = vmatprep.subr.bf16.mxu0 0
    %178 = vmatpush1.bf16.msra.mxu0 %v171
    %179 = vmatprep.subr.bf16.mxu0 0
    %180 = vmatpush1.bf16.msra.mxu0 0
    %181 = vmatprep.subr.bf16.mxu0 0
    %182 = vmatpush1.bf16.msra.mxu0 0
    %183 = vmatprep.subr.bf16.mxu0 0
    %184 = vmatpush1.bf16.msra.mxu0 0
    %185 = vmatprep.subr.bf16.mxu0 0
    %186 = vmatpush1.bf16.msra.mxu0 0
    %187 = vmatprep.subr.bf16.mxu0 0
    %188 = vmatpush1.bf16.msra.mxu0 0
    %189 = vmatprep.subr.bf16.mxu0 0
    %190 = vmatpush1.bf16.msra.mxu0 0
    %191 = vmatprep.subr.bf16.mxu0 0
    %192 = vmatpush1.bf16.msra.mxu0 0
    %193 = vmatprep.subr.bf16.mxu0 0
    %194 = vmatpush1.bf16.msra.mxu0 0
    %195 = vmatprep.subr.bf16.mxu0 0
    %196 = vmatpush1.bf16.msra.mxu0 0
    %197 = vmatprep.subr.bf16.mxu0 0
    %198 = vmatpush1.bf16.msra.mxu0 0
    %199 = vmatprep.subr.bf16.mxu0 0
    %200 = vmatpush1.bf16.msra.mxu0 0
    %201 = vmatprep.subr.bf16.mxu0 0
    %202 = vmatpush1.bf16.msra.mxu0 0
    %203 = vmatprep.subr.bf16.mxu0 0
    %204 = vmatpush1.bf16.msra.mxu0 0
    %205 = vmatprep.mubr.bf16.mxu0 0
    %206 = vmatmul.mubr.bf16.gmra.mrb[0].mxu0 %v168
    %v207 = vpop.f32.mrb[0].mxu0
    %v208 = vadd.f32 %v164, %v207
    %v209 = vpop.f32.mrb[0].mxu0
    %v210 = vpop.f32.mrb[0].mxu0
    %v211 = vpop.f32.mrb[0].mxu0
    %212 = vdwg.mxu0
    %v213 = vmax.f32 %v208, 0.0
    %vm214 = vcmask 517120
    %v216 = vsel %vm214, %v56, 4286644096
    %v219 = vsel %vm214, %v57, 4286644096
    %v222 = vsel %vm214, %v58, 4286644096
    %v224 = vsel %vm214, %v59, 4286644096
    %v226 = vmax.bf16 %v216, %v219
    %v227 = vmax.bf16 %v222, %v224
    %v228 = vmax.bf16 %v226, %v227
    %v229 = vunpack.c.l.bf16 %v228
    %231 = vset.pattern.permute.xlu0 0
    %232 = vperm.xlu0 %231, %v54
    %v233 = vpop.permute.xlu0 %232
    %v235 = vmul.f32 %v229, %v233
    %237 = vset.pattern.permute.xlu0 0
    %238 = vperm.xlu0 %237, %v55
    %v239 = vpop.permute.xlu0 %238
    %v241 = vadd.f32 %v235, %v239
    %v242 = vmax.f32 %v241, 0.0
    %v244 = vcombine.low %v242, %v242
    %v246 = vsel %vm146, %v213, %v244
    %vm247 = vcmask 523264
    %248 = vst.msk [vmem:[#allocation5] sm:$0xff] %vm247, %v246
    %s249 = scalar_lea.vmem [#allocation2], 8
    %v250 = vld [vmem:[%s249] sm:$0x3]
    %v251 = vld [vmem:[%s249 + $0x2] sm:$0x3]
    %v252 = vld [vmem:[%s249 + $0x4] sm:$0x3]
    %v253 = vld [vmem:[%s249 + $0x6] sm:$0x3]
    %v256 = vunpack.c.l.s4 1983009808
    %v257 = vunpack.c.0.s8 %v256
    %v258 = vlaneseq
    %v259 = vshrl.u32 %v258, 7
    %v260 = vsub.s32 %v257, %v259
    %v261 = vrot.slane %v253, %v260
    %262 = vrot.lane.b32.xlu0 %v261, 9
    %v263 = vpop.permute.xlu0 %262
    %v265 = vsel %vm70, 0, %v263
    %v267 = vsel %vm77, %v265, 0
    %v270 = vunpack.c.l.s4 1983009808
    %v271 = vunpack.c.0.s8 %v270
    %v272 = vlaneseq
    %v273 = vshrl.u32 %v272, 7
    %v274 = vsub.s32 %v271, %v273
    %v275 = vrot.slane %v252, %v274
    %276 = vrot.lane.b32.xlu0 %v275, 8
    %v277 = vpop.permute.xlu0 %276
    %v279 = vsel %vm89, 0, %v277
    %280 = vrot.lane.b32.xlu0 %v261, 8
    %v281 = vpop.permute.xlu0 %280
    %v283 = vsel %vm89, 0, %v281
    %v286 = vunpack.c.l.s4 1983009808
    %v287 = vunpack.c.0.s8 %v286
    %v288 = vlaneseq
    %v289 = vshrl.u32 %v288, 7
    %v290 = vsub.s32 %v287, %v289
    %v291 = vrot.slane %v251, %v290
    %292 = vrot.lane.b32.xlu0 %v291, 1
    %v293 = vpop.permute.xlu0 %292
    %v295 = vsel %vm106, 0, %v293
    %v297 = vsel %vm77, %v295, 0
    %298 = vrot.lane.b32.xlu0 %v261, 1
    %v299 = vpop.permute.xlu0 %298
    %v301 = vsel %vm106, 0, %v299
    %v303 = vsel %vm77, %v301, 0
    %v305 = vrot.slane %v279, 6
    %v307 = vrot.slane %v283, 4
    %v309 = vrot.slane %v297, 2
    %v310 = vcombine.low %v251, %v251
    %v312 = vunpack.c.l.s4 1983009808
    %v313 = vunpack.c.0.s8 %v312
    %v314 = vlaneseq
    %v315 = vshrl.u32 %v314, 7
    %v316 = vsub.s32 %v313, %v315
    %v317 = vrot.slane %v310, %v316
    %v319 = vrot.slane %v303, 4
    %v320 = vcombine.low %v252, %v252
    %v322 = vunpack.c.l.s4 1983009808
    %v323 = vunpack.c.0.s8 %v322
    %v324 = vlaneseq
    %v325 = vshrl.u32 %v324, 7
    %v326 = vsub.s32 %v323, %v325
    %v327 = vrot.slane %v320, %v326
    %v328 = vcombine.low %v327, %v327
    %v331 = vsel %vm142, %v267, %v305
    %v333 = vsel %vm146, %v331, %v307
    %v335 = vsel %vm149, %v333, %v309
    %v339 = vsel %vm142, %v250, %v317
    %v341 = vsel %vm146, %v339, %v319
    %v343 = vsel %vm149, %v341, %v328
    %v346 = vsel %vm142, %v253, 0
    %348 = vmatprep.subr.bf16.mxu0 0
    %349 = vmatpush1.bf16.msra.mxu0 %v335
    %350 = vmatprep.subr.bf16.mxu0 0
    %351 = vmatpush1.bf16.msra.mxu0 %v343
    %352 = vmatprep.subr.bf16.mxu0 0
    %353 = vmatpush1.bf16.msra.mxu0 %v346
    %354 = vmatprep.subr.bf16.mxu0 0
    %355 = vmatpush1.bf16.msra.mxu0 0
    %356 = vmatprep.subr.bf16.mxu0 0
    %357 = vmatpush1.bf16.msra.mxu0 0
    %358 = vmatprep.subr.bf16.mxu0 0
    %359 = vmatpush1.bf16.msra.mxu0 0
    %360 = vmatprep.subr.bf16.mxu0 0
    %361 = vmatpush1.bf16.msra.mxu0 0
    %362 = vmatprep.subr.bf16.mxu0 0
    %363 = vmatpush1.bf16.msra.mxu0 0
    %364 = vmatprep.subr.bf16.mxu0 0
    %365 = vmatpush1.bf16.msra.mxu0 0
    %366 = vmatprep.subr.bf16.mxu0 0
    %367 = vmatpush1.bf16.msra.mxu0 0
    %368 = vmatprep.subr.bf16.mxu0 0
    %369 = vmatpush1.bf16.msra.mxu0 0
    %370 = vmatprep.subr.bf16.mxu0 0
    %371 = vmatpush1.bf16.msra.mxu0 0
    %372 = vmatprep.subr.bf16.mxu0 0
    %373 = vmatpush1.bf16.msra.mxu0 0
    %374 = vmatprep.subr.bf16.mxu0 0
    %375 = vmatpush1.bf16.msra.mxu0 0
    %376 = vmatprep.subr.bf16.mxu0 0
    %377 = vmatpush1.bf16.msra.mxu0 0
    %378 = vmatprep.subr.bf16.mxu0 0
    %379 = vmatpush1.bf16.msra.mxu0 0
    %380 = vmatprep.mubr.bf16.mxu0 0
    %381 = vmatmul.mubr.bf16.gmra.mrb[0].mxu0 %v168
    %v382 = vpop.f32.mrb[0].mxu0
    %v383 = vadd.f32 %v164, %v382
    %v384 = vpop.f32.mrb[0].mxu0
    %v385 = vpop.f32.mrb[0].mxu0
    %v386 = vpop.f32.mrb[0].mxu0
    %387 = vdwg.mxu0
    %v388 = vmax.f32 %v383, 0.0
    %v389 = vsel %vm214, %v250, 4286644096
    %v392 = vsel %vm214, %v251, 4286644096
    %v395 = vsel %vm214, %v252, 4286644096
    %v397 = vsel %vm214, %v253, 4286644096
    %v399 = vmax.bf16 %v389, %v392
    %v400 = vmax.bf16 %v395, %v397
    %v401 = vmax.bf16 %v399, %v400
    %v402 = vunpack.c.l.bf16 %v401
    %v403 = vmul.f32 %v402, %v233
    %v404 = vadd.f32 %v403, %v239
    %v405 = vmax.f32 %v404, 0.0
    %v407 = vcombine.low %v405, %v405
    %v409 = vsel %vm146, %v388, %v407
    %s410 = scalar_lea.vmem [#allocation5], 8
    %411 = vst.msk [vmem:[%s410] sm:$0xff] %vm247, %v409
    // Predicated region
    $region26: #{tpu_custom_call.1} parent=1 // pred_check
      _
    $region27: #{tpu_custom_call.1} parent=1 // pred_check_branch
      %413 = sbr.rel (0) target = $region29
    $region28: #{tpu_custom_call.1} parent=1 // pred_region
      %s415 = ssub.s32 256, 256
      %416 = vsyncadd [#allocation4], %s415
      %s417 = sshll.u32 [#allocation5], 4
      %s418 = int_to_ptr.vmem [resolvable:$true] %s417
      %423 = dma.vmem_to_hbm [thread:$0]  %s418, 256, %s5, [#allocation4], 128, 128, 8
    $region29: #{tpu_custom_call.1} parent=1 // pred_fallthru
      _
    // Predicated region
    $region30: #{tpu_custom_call.1} parent=1 // pred_check
      _
    $region31: #{tpu_custom_call.1} parent=1 // pred_check_branch
      %425 = sbr.rel (0) target = $region33
    $region32: #{tpu_custom_call.1} parent=1 // pred_region
      %426 = dma.done [#allocation4], 256
    $region33: #{tpu_custom_call.1} parent=1 // pred_fallthru
      _
    %427 = vsyncpa [#allocation3], 1
    %428 = vsyncpa [#allocation4], 1

</llo_original>
